<compile_context>
chip_gen: v5e
topology: v5e:2x2
jax: 0.10.0
libtpu: 0.0.40
codegen_flags: <defaults>
</compile_context>

<pallas_src>
import functools
import numpy as np
import jax
import jax.numpy as jnp
from jax import lax
from jax.experimental import pallas as pl
from jax.experimental.pallas import tpu as pltpu

LANE = 128
VMEM_SPEC = pl.BlockSpec(memory_space=pltpu.MemorySpace.VMEM)


def _round_up(n, m):
    return (n + m - 1) // m * m


def _row_tile(n, cap=2048):
    # row-tile: multiple of 8 sublanes, capped so blocks stay VMEM-friendly
    return min(cap, _round_up(n, 8))


def _vmem_limit_bytes():
    # generation-dependent VMEM budget: ~96 MiB on v5e/v6e (128 MiB physical),
    # 48 MiB on v7x (64 MiB physical).
    try:
        cap = int(getattr(pltpu.get_tpu_info(), "vmem_capacity_bytes",
                          128 * 1024 * 1024))
    except Exception:
        cap = 128 * 1024 * 1024
    return int(min(96 * 1024 * 1024, (cap * 3) // 4))


VMEM_LIMIT = _vmem_limit_bytes()


# ----------------------------------------------------------------------------
# Kernel 1: fused char Conv3d(kernel=(1, fs, E)) + max over char positions.
#   emb : (TN*C, E)  bf16 char embeddings, 2-D, row-tiled over words (TN)
#   w   : (E, sum_i fs_i*opad_i) bf16   per-(filter, tap) blocks, each padded
#                                       to a 128-lane multiple (zeros beyond o_n)
#   b   : (1, OC_PAD) f32               per-channel bias packed in first lanes
#   out : (TN, OC_PAD) f32              max_j conv_j + b, lane-dense store
# ----------------------------------------------------------------------------
def char_conv_kernel(emb_ref, w_ref, b_ref, o_ref, *, filter_sizes,
                     filter_nums, chars):
    C = chars
    TNC, _ = emb_ref.shape
    TN = TNC // C
    W = w_ref.shape[1]

    # one MXU matmul: every (filter, tap) channel at every char position
    y = jnp.dot(emb_ref[...], w_ref[...], preferred_element_type=jnp.float32)
    y = y.reshape(TN, C, W)          # tile-friendly when C % 8 == 0

    parts = []
    col = 0
    for fs, o_n in zip(filter_sizes, filter_nums):
        opad = _round_up(o_n, LANE)  # per-tap block width (128-aligned slices)
        J = C - fs + 1
        acc = y[:, 0:J, col:col + opad]                       # tap k = 0
        for k in range(1, fs):                                # shift-add taps
            acc = acc + y[:, k:k + J, col + k * opad: col + (k + 1) * opad]
        parts.append(jnp.max(acc, axis=1)[:, :o_n])           # max over positions
        col += fs * opad
    o_total = sum(filter_nums)
    pad = o_ref.shape[1] - o_total
    if pad > 0:
        parts.append(jnp.zeros((TN, pad), jnp.float32))
    # bias after max == max(conv + bias): bias is constant per channel and the
    # reference model has NO nonlinearity between the conv and the max-pool.
    o_ref[...] = jnp.concatenate(parts, axis=-1) + b_ref[...]


def char_conv_maxpool(emb2d, n_words, chars, w_all, b_pad,
                      filter_sizes, filter_nums):
    # emb2d: (n_words*chars, E) bf16
    E = emb2d.shape[1]
    o_total = sum(filter_nums)
    oc_pad = b_pad.shape[1]
    tn = _row_tile(n_words)
    n_pad = _round_up(n_words, tn)
    if n_pad != n_words:
        emb2d = jnp.pad(emb2d, ((0, (n_pad - n_words) * chars), (0, 0)))
    kern = functools.partial(char_conv_kernel,
                             filter_sizes=tuple(filter_sizes),
                             filter_nums=tuple(filter_nums),
                             chars=chars)
    out = pl.pallas_call(
        kern,
        out_shape=jax.ShapeDtypeStruct((n_pad, oc_pad), jnp.float32),
        grid=(n_pad // tn,),
        in_specs=[pl.BlockSpec((tn * chars, E), lambda i: (i, 0)),
                  pl.BlockSpec((E, w_all.shape[1]), lambda i: (0, 0)),
                  pl.BlockSpec((1, oc_pad), lambda i: (0, 0))],
        out_specs=pl.BlockSpec((tn, oc_pad), lambda i: (i, 0)),
        compiler_params=pltpu.CompilerParams(
            dimension_semantics=("parallel",),
            vmem_limit_bytes=VMEM_LIMIT),
    )(emb2d, w_all, b_pad)
    return out[:n_words, :o_total]


# ----------------------------------------------------------------------------
# Kernel 2: fused bidirectional LSTM layer with length masking.
#   x    : (S*B, D) bf16   time-major input, flattened (row s*B + b)
#   mask : (S, B, 1) f32   1.0 where t < len[b] else 0.0
#   wih  : (D, 8H) bf16    [fwd i|f|g|o | bwd i|f|g|o]
#   whhf : (H, 4H) bf16    whhb : (H, 4H) bf16
#   b    : (1, 8H) f32     b_ih + b_hh for both directions
#   out  : (S, B, 2H) f32  [fwd | bwd], zeros at padded positions
# Input projection is hoisted out of the recurrence as one big MXU matmul into
# a bf16 VMEM scratch; h/c live in the loop carry (vregs); outputs are written
# in place per step; gates use one tanh pass via sigmoid(x)=0.5*(1+tanh(x/2)).
# ----------------------------------------------------------------------------
def bilstm_layer_kernel(x_ref, mask_ref, wih_ref, whhf_ref, whhb_ref, b_ref,
                        o_ref, g_scr):
    S, B, _ = mask_ref.shape
    H = whhf_ref.shape[0]

    # (1) input projection for BOTH directions, hoisted out of the serial loop.
    # The reshape to (S, B, 8H) is a no-op layout when B % 8 == 0.
    proj = jnp.dot(x_ref[...], wih_ref[...],
                   preferred_element_type=jnp.float32) + b_ref[...]
    g_scr[...] = proj.reshape(S, B, 8 * H).astype(jnp.bfloat16)

    # recurrent weights read once, kept live across the recurrence
    whh_f = whhf_ref[...]
    whh_b = whhb_ref[...]

    # lane mask over the concatenated [fwd i|f|g|o | bwd i|f|g|o] gate layout:
    # True on the two g-gate (tanh) H-slices, False on i/f/o (sigmoid).
    lane = lax.broadcasted_iota(jnp.int32, (B, 8 * H), 1)
    lane4 = lane % (4 * H)
    is_g = (lane4 >= 2 * H) & (lane4 < 3 * H)

    zeros_h = jnp.zeros((B, H), jnp.float32)

    def step(s, carry):
        h_f, c_f, h_b, c_b = carry
        t_f = s
        t_b = S - 1 - s

        # gate pre-activations; the two MXU pushes are issued back-to-back so
        # the Whh weight loads pipeline.
        # TODO(synk): pltpu.matmul_push_rhs/matmul_acc_lhs could keep Whh
        # staged in the MXU across all S steps instead of re-pushing per step.
        hh_f = jnp.dot(h_f.astype(jnp.bfloat16), whh_f,
                       preferred_element_type=jnp.float32)
        hh_b = jnp.dot(h_b.astype(jnp.bfloat16), whh_b,
                       preferred_element_type=jnp.float32)
        g_f = g_scr[t_f, :, 0:4 * H].astype(jnp.float32)
        g_b = g_scr[t_b, :, 4 * H:8 * H].astype(jnp.float32)
        pre = jnp.concatenate([g_f + hh_f, g_b + hh_b], axis=-1)   # (B, 8H)

        # single tanh pass: sigmoid(x) = 0.5 * (1 + tanh(x / 2))
        z = jnp.where(is_g, pre, 0.5 * pre)
        t = jnp.tanh(z)
        act = jnp.where(is_g, t, 0.5 * t + 0.5)

        i_f = act[:, 0 * H:1 * H]; f_f = act[:, 1 * H:2 * H]
        gg_f = act[:, 2 * H:3 * H]; o_f = act[:, 3 * H:4 * H]
        i_b = act[:, 4 * H:5 * H]; f_b = act[:, 5 * H:6 * H]
        gg_b = act[:, 6 * H:7 * H]; o_b = act[:, 7 * H:8 * H]

        c_f_new = f_f * c_f + i_f * gg_f
        h_f_new = o_f * jnp.tanh(c_f_new)
        c_b_new = f_b * c_b + i_b * gg_b
        h_b_new = o_b * jnp.tanh(c_b_new)

        m_f = mask_ref[t_f] > 0.5                     # (B, 1) bool
        m_b = mask_ref[t_b] > 0.5

        # outputs written in place; zeros at padded positions (as
        # pad_packed_sequence produces).  NOTE: keep H a multiple of 128 in
        # production so these half-lane writes stay unmasked.
        o_ref[t_f, :, 0:H] = jnp.where(m_f, h_f_new, zeros_h)
        o_ref[t_b, :, H:2 * H] = jnp.where(m_b, h_b_new, zeros_h)

        # masked state carry (state frozen past the sequence end)
        h_f = jnp.where(m_f, h_f_new, h_f)
        c_f = jnp.where(m_f, c_f_new, c_f)
        h_b = jnp.where(m_b, h_b_new, h_b)
        c_b = jnp.where(m_b, c_b_new, c_b)
        return h_f, c_f, h_b, c_b

    lax.fori_loop(0, S, step, (zeros_h, zeros_h, zeros_h, zeros_h))


def bilstm_layer(x2d, mask3d, wih_cat, whh_f, whh_b, b_cat, seq, batch, hidden):
    # TODO(synk): on v7x (2 TensorCores) split the two directions across cores
    # (grid=(2,), dimension_semantics=("parallel",)); kept fused here so the
    # two independent recurrence chains hide each other's latency on 1-TC
    # v5e/v6e chips.
    # TODO(synk): for production S, tile the sequence with an 'arbitrary' grid
    # axis (carry h/c in persistent scratch) so x/g_scr need not be fully
    # VMEM-resident on v7x's 64 MiB VMEM.
    return pl.pallas_call(
        bilstm_layer_kernel,
        out_shape=jax.ShapeDtypeStruct((seq, batch, 2 * hidden), jnp.float32),
        in_specs=[VMEM_SPEC] * 6,
        out_specs=VMEM_SPEC,
        scratch_shapes=[pltpu.VMEM((seq, batch, 8 * hidden), jnp.bfloat16)],
        compiler_params=pltpu.CompilerParams(vmem_limit_bytes=VMEM_LIMIT),
    )(x2d, mask3d, wih_cat, whh_f, whh_b, b_cat)


# ----------------------------------------------------------------------------
# Kernel 3: tanh + Linear head, grid-tiled over rows, lane-padded output.
#   x : (N, 2H)   w : (2H, L_PAD) bf16   b : (1, L_PAD)   out : (N, L_PAD)
# ----------------------------------------------------------------------------
def head_kernel(x_ref, w_ref, b_ref, o_ref):
    xt = jnp.tanh(x_ref[...]).astype(jnp.bfloat16)
    o_ref[...] = (jnp.dot(xt, w_ref[...], preferred_element_type=jnp.float32)
                  + b_ref[...])


def tanh_linear(x, w_pad, b_pad, label_num):
    N, D2 = x.shape
    l_pad = w_pad.shape[1]
    tn = _row_tile(N)
    n_pad = _round_up(N, tn)
    if n_pad != N:
        x = jnp.pad(x, ((0, n_pad - N), (0, 0)))
    out = pl.pallas_call(
        head_kernel,
        out_shape=jax.ShapeDtypeStruct((n_pad, l_pad), jnp.float32),
        grid=(n_pad // tn,),
        in_specs=[pl.BlockSpec((tn, D2), lambda i: (i, 0)),
                  pl.BlockSpec((D2, l_pad), lambda i: (0, 0)),
                  pl.BlockSpec((1, l_pad), lambda i: (0, 0))],
        out_specs=pl.BlockSpec((tn, l_pad), lambda i: (i, 0)),
        compiler_params=pltpu.CompilerParams(
            dimension_semantics=("parallel",),
            vmem_limit_bytes=VMEM_LIMIT),
    )(x, w_pad, b_pad)
    return out[:N, :label_num]


# ----------------------------------------------------------------------------
# Glue: parameter init + forward
# ----------------------------------------------------------------------------
def init_params(key, cfg):
    assert sum(cfg['conv_filter_nums']) == cfg['char_emb_dim']
    ks = iter(jax.random.split(key, 64))
    E, Ec, H, L = (cfg['embed_dim'], cfg['char_emb_dim'],
                   cfg['hidden_size'], cfg['label_num'])

    def uni(k, shape, scale):
        return jax.random.uniform(k, shape, jnp.float32, -scale, scale)

    params = {}
    we = uni(next(ks), (cfg['vocab_size'], E), 0.1)
    params['word_embed'] = we.at[cfg['paddingId']].set(0.0)     # padding row = 0
    ce = uni(next(ks), (cfg['char_size'], Ec), 0.1)
    params['char_embed'] = ce.at[cfg['char_paddingId']].set(0.0)

    # Char conv: PyTorch Conv3d weight (O,1,1,fs,Ec) split per tap k into
    # (Ec, O) blocks, each lane-padded to a 128-multiple, concatenated along
    # columns -> one (Ec, sum fs*opad) matmul weight.  Stored bf16.
    w_blocks, b_blocks = [], []
    for fs, o in zip(cfg['conv_filter_sizes'], cfg['conv_filter_nums']):
        scale = 1.0 / np.sqrt(fs * Ec)
        opad = _round_up(o, LANE)
        for _ in range(fs):
            blk = jnp.zeros((Ec, opad), jnp.float32)
            w_blocks.append(blk.at[:, :o].set(uni(next(ks), (Ec, o), scale)))
        b_blocks.append(uni(next(ks), (1, o), scale))
    params['conv_w_all'] = jnp.concatenate(w_blocks, axis=1).astype(jnp.bfloat16)
    o_total = sum(cfg['conv_filter_nums'])
    oc_pad = _round_up(o_total, LANE)
    b_cat = jnp.concatenate(b_blocks, axis=1)
    params['conv_b_pad'] = (jnp.zeros((1, oc_pad), jnp.float32)
                            .at[:, :o_total].set(b_cat))

    params['lstm'] = []
    d_in = E + Ec
    for _ in range(cfg['num_layers']):
        scale = 1.0 / np.sqrt(H)
        wih_f = uni(next(ks), (d_in, 4 * H), scale)             # W_ih^T fwd (i|f|g|o)
        wih_b = uni(next(ks), (d_in, 4 * H), scale)             # W_ih^T bwd
        whh_f = uni(next(ks), (H, 4 * H), scale)                # W_hh^T fwd
        whh_b = uni(next(ks), (H, 4 * H), scale)                # W_hh^T bwd
        b_f = uni(next(ks), (1, 4 * H), scale) + uni(next(ks), (1, 4 * H), scale)
        b_b = uni(next(ks), (1, 4 * H), scale) + uni(next(ks), (1, 4 * H), scale)
        params['lstm'].append(dict(
            wih_cat=jnp.concatenate([wih_f, wih_b], axis=1).astype(jnp.bfloat16),
            whh_f=whh_f.astype(jnp.bfloat16),
            whh_b=whh_b.astype(jnp.bfloat16),
            b_cat=jnp.concatenate([b_f, b_b], axis=1)))
        d_in = 2 * H

    scale = 1.0 / np.sqrt(2 * H)
    l_pad = _round_up(L, LANE)
    lw = uni(next(ks), (2 * H, L), scale)
    lb = uni(next(ks), (1, L), scale)
    params['lin_w_pad'] = (jnp.zeros((2 * H, l_pad), jnp.float32)
                           .at[:, :L].set(lw)).astype(jnp.bfloat16)
    params['lin_b_pad'] = jnp.zeros((1, l_pad), jnp.float32).at[:, :L].set(lb)
    return params


def char_forward(params, char, cfg):
    B, S, C = char.shape
    Ec = cfg['char_emb_dim']
    # embedding gather stays in XLA; kernel gets a 2-D (N*C, E) bf16 slab
    emb = jnp.take(params['char_embed'], char.reshape(-1), axis=0)
    emb2d = emb.reshape(B * S * C, Ec).astype(jnp.bfloat16)
    out = char_conv_maxpool(emb2d, B * S, C, params['conv_w_all'],
                            params['conv_b_pad'],
                            cfg['conv_filter_sizes'], cfg['conv_filter_nums'])
    return out.reshape(B, S, -1)


def cnn_bilstm_forward(params, word, char, sen_len, cfg):
    B, S = word.shape
    H = cfg['hidden_size']

    encoded_char = char_forward(params, char, cfg)                 # (B, S, sum(filters))
    # TODO(synk): nn.Dropout applied in eval mode -> identity here.
    encoded_word = jnp.take(params['word_embed'], word.reshape(-1), axis=0)
    encoded_word = encoded_word.reshape(B, S, -1)
    x = jnp.concatenate([encoded_word, encoded_char], axis=-1)     # (B, S, D)

    # Equivalent of sort + pack_padded_sequence + pad_packed_sequence + unsort:
    # length masking inside the LSTM kernel, output trimmed to max(sen_len).
    # TODO(synk): t_max / mask assume host-concrete sen_len (not traced under jit).
    sen_len_np = np.asarray(sen_len, dtype=np.int32)
    t_max = int(sen_len_np.max())
    mask3d = (jnp.arange(S, dtype=jnp.int32)[:, None]
              < jnp.asarray(sen_len_np)[None, :]).astype(jnp.float32)[:, :, None]

    layer_in = jnp.transpose(x, (1, 0, 2)).astype(jnp.float32)     # (S, B, D)
    for layer in range(cfg['num_layers']):
        p = params['lstm'][layer]
        x2d = layer_in.reshape(S * B, -1).astype(jnp.bfloat16)     # free reshape
        layer_in = bilstm_layer(x2d, mask3d, p['wih_cat'], p['whh_f'],
                                p['whh_b'], p['b_cat'], S, B, H)   # (S, B, 2H)

    out = jnp.transpose(layer_in, (1, 0, 2))[:, :t_max, :]         # (B, T_max, 2H)
    flat = out.reshape(B * t_max, 2 * H)
    logits = tanh_linear(flat, params['lin_w_pad'], params['lin_b_pad'],
                         cfg['label_num'])
    return logits.reshape(B, t_max, cfg['label_num'])


if __name__ == "__main__":
    cfg = dict(
        vocab_size=50, char_size=30,
        embed_dim=16, char_emb_dim=16,
        label_num=5, paddingId=0, char_paddingId=0,
        conv_filter_sizes=[2, 3], conv_filter_nums=[8, 8],   # sums to char_emb_dim
        hidden_size=16, num_layers=1,
    )
    B, S, C = 2, 8, 8
    sen_len = np.array([8, 5], dtype=np.int32)

    key = jax.random.PRNGKey(0)
    k_word, k_char, k_par = jax.random.split(key, 3)
    word = jax.random.randint(k_word, (B, S), 1, cfg['vocab_size'], dtype=jnp.int32)
    char = jax.random.randint(k_char, (B, S, C), 1, cfg['char_size'], dtype=jnp.int32)
    pos = jnp.arange(S, dtype=jnp.int32)
    word = jnp.where(pos[None, :] < jnp.asarray(sen_len)[:, None], word, cfg['paddingId'])
    char = jnp.where(pos[None, :, None] < jnp.asarray(sen_len)[:, None, None],
                     char, cfg['char_paddingId'])

    params = init_params(k_par, cfg)
    logits = cnn_bilstm_forward(params, word, char, sen_len, cfg)
    logits = jax.block_until_ready(logits)
    assert logits.shape == (B, int(sen_len.max()), cfg['label_num'])
    assert bool(jnp.all(jnp.isfinite(logits)))
    print("KERNEL_OK")
</pallas_src>

<mosaic_0001>
module attributes {stable_mosaic.version = 11 : i64} {
  func.func @char_conv_kernel(%arg0: i32, %arg1: memref<128x16xbf16, #tpu.memory_space<vmem>>, %arg2: memref<16x640xbf16, #tpu.memory_space<vmem>>, %arg3: memref<1x128xf32, #tpu.memory_space<vmem>>, %arg4: memref<16x128xf32, #tpu.memory_space<vmem>>) attributes {dimension_semantics = [#tpu.dimension_semantics<parallel>], iteration_bounds = array<i64: 1>, scalar_prefetch = 0 : i64, scratch_operands = 0 : i64, tpu.core_type = #tpu.core_type<tc>, window_params = [{transform_indices = @transform_0, window_bounds = array<i64: 128, 16>}, {pipeline_mode = #tpu.pipeline_mode<synchronous>, transform_indices = @transform_1, window_bounds = array<i64: 16, 640>}, {pipeline_mode = #tpu.pipeline_mode<synchronous>, transform_indices = @transform_2, window_bounds = array<i64: 1, 128>}, {transform_indices = @transform_3, window_bounds = array<i64: 16, 128>}]} {
    %c0 = arith.constant 0 : index
    %c0_0 = arith.constant 0 : index
    %0 = vector.load %arg1[%c0, %c0_0] : memref<128x16xbf16, #tpu.memory_space<vmem>>, vector<128x16xbf16>
    %c0_1 = arith.constant 0 : index
    %c0_2 = arith.constant 0 : index
    %1 = vector.load %arg2[%c0_1, %c0_2] : memref<16x640xbf16, #tpu.memory_space<vmem>>, vector<16x640xbf16>
    %cst = arith.constant dense<0.000000e+00> : vector<128x640xf32>
    %2 = tpu.matmul %0, %1, %cst {dimension_numbers = #tpu.dot_dimension_numbers<[1], [0], [0], [1], [0, 0, 1, 1], [], []>} : vector<128x16xbf16>, vector<16x640xbf16>, vector<128x640xf32> -> vector<128x640xf32>
    %3 = vector.shape_cast %2 : vector<128x640xf32> to vector<16x8x640xf32>
    %4 = vector.extract_strided_slice %3 {offsets = [0, 0, 0], sizes = [16, 7, 128], strides = [1, 1, 1]} : vector<16x8x640xf32> to vector<16x7x128xf32>
    %5 = vector.extract_strided_slice %3 {offsets = [0, 1, 128], sizes = [16, 7, 128], strides = [1, 1, 1]} : vector<16x8x640xf32> to vector<16x7x128xf32>
    %6 = arith.addf %4, %5 : vector<16x7x128xf32>
    %cst_3 = arith.constant dense<0xFF800000> : vector<16x128xf32>
    %7 = vector.multi_reduction <maximumf>, %6, %cst_3 [1] : vector<16x7x128xf32> to vector<16x128xf32>
    %8 = vector.extract_strided_slice %7 {offsets = [0, 0], sizes = [16, 8], strides = [1, 1]} : vector<16x128xf32> to vector<16x8xf32>
    %9 = vector.extract_strided_slice %3 {offsets = [0, 0, 256], sizes = [16, 6, 128], strides = [1, 1, 1]} : vector<16x8x640xf32> to vector<16x6x128xf32>
    %10 = vector.extract_strided_slice %3 {offsets = [0, 1, 384], sizes = [16, 6, 128], strides = [1, 1, 1]} : vector<16x8x640xf32> to vector<16x6x128xf32>
    %11 = arith.addf %9, %10 : vector<16x6x128xf32>
    %12 = vector.extract_strided_slice %3 {offsets = [0, 2, 512], sizes = [16, 6, 128], strides = [1, 1, 1]} : vector<16x8x640xf32> to vector<16x6x128xf32>
    %13 = arith.addf %11, %12 : vector<16x6x128xf32>
    %cst_4 = arith.constant dense<0xFF800000> : vector<16x128xf32>
    %14 = vector.multi_reduction <maximumf>, %13, %cst_4 [1] : vector<16x6x128xf32> to vector<16x128xf32>
    %15 = vector.extract_strided_slice %14 {offsets = [0, 0], sizes = [16, 8], strides = [1, 1]} : vector<16x128xf32> to vector<16x8xf32>
    %cst_5 = arith.constant 0.000000e+00 : f32
    %16 = vector.broadcast %cst_5 : f32 to vector<16x112xf32>
    %17 = tpu.concatenate %8, %15, %16 in 1 : vector<16x8xf32>, vector<16x8xf32>, vector<16x112xf32> -> vector<16x128xf32>
    %c0_6 = arith.constant 0 : index
    %c0_7 = arith.constant 0 : index
    %18 = vector.load %arg3[%c0_6, %c0_7] : memref<1x128xf32, #tpu.memory_space<vmem>>, vector<1x128xf32>
    %19 = vector.broadcast %18 : vector<1x128xf32> to vector<16x128xf32>
    %20 = arith.addf %17, %19 : vector<16x128xf32>
    %c0_8 = arith.constant 0 : index
    %c0_9 = arith.constant 0 : index
    %21 = vector.load %arg4[%c0_8, %c0_9] : memref<16x128xf32, #tpu.memory_space<vmem>>, vector<16x128xf32>
    tpu.vector_store %arg4[%c0_8, %c0_9], %20 {strides = array<i32>} : memref<16x128xf32, #tpu.memory_space<vmem>>, vector<16x128xf32>,
    return
  }
  func.func @transform_0(%arg0: i32) -> (i32, i32) {
    %c0_i32 = arith.constant 0 : i32
    %c0_i32_0 = arith.constant 0 : i32
    return %arg0, %c0_i32 : i32, i32
  }
  func.func @transform_1(%arg0: i32) -> (i32, i32) {
    %c0_i32 = arith.constant 0 : i32
    %c0_i32_0 = arith.constant 0 : i32
    %c0_i32_1 = arith.constant 0 : i32
    return %c0_i32, %c0_i32_0 : i32, i32
  }
  func.func @transform_2(%arg0: i32) -> (i32, i32) {
    %c0_i32 = arith.constant 0 : i32
    %c0_i32_0 = arith.constant 0 : i32
    %c0_i32_1 = arith.constant 0 : i32
    return %c0_i32, %c0_i32_0 : i32, i32
  }
  func.func @transform_3(%arg0: i32) -> (i32, i32) {
    %c0_i32 = arith.constant 0 : i32
    %c0_i32_0 = arith.constant 0 : i32
    return %arg0, %c0_i32 : i32, i32
  }
}

</mosaic_0001>

<llo_original>
// kernel: tpu_custom_call.1
$region0: #{tpu_custom_call.1}
  #allocation0 [shape = 'u32[]', space=smem, size = 0x4, offset = 0x4, fixed_abs, tag = 'smem constant byte address 0x4 - core index']
  #allocation1 [shape = 'u32[72,128]{1,0:T(1,128)}', space=vmem, size = 0x9000, scoped, tag = 'internal scratch']
  %s0 = inlined_call_operand.vmem [shape: bf16[128,16], index: 0, kind: input, shape index: {}]
  %s1 = inlined_call_operand.vmem [shape: bf16[16,640], index: 1, kind: input, shape index: {}]
  %s2 = inlined_call_operand.vmem [shape: f32[1,128], index: 2, kind: input, shape index: {}]
  %s3 = inlined_call_operand.hbm [shape: f32[16,128], index: 3, kind: output, shape index: {}]
  %s4 = sld [smem:[#allocation0]]
  $region22: #{tpu_custom_call.1} parent=0
    _
  %s6 = ssub.s32 1, %s4
  %s7 = scalar_select 0, %s6, %s4
  $region1: #{tpu_custom_call.1} parent=0
    #allocation2 [shape = 'u8[8192]{0}', space=vmem, size = 0x2000, scoped, tag = 'output window, operand 0, single buffered']
    #allocation3 [shape = 's32[1]{0}', space=sflag, size = 0x4, scoped, tag = 'scoped memory for tpu_custom_call.1']
    %8 = vsyncpa [#allocation3], 0
    // Predicated region
    $region2: #{tpu_custom_call.1} parent=1 // pred_check
      _
    $region3: #{tpu_custom_call.1} parent=1 // pred_check_branch
      %10 = sbr.rel (0) target = $region5
    $region4: #{tpu_custom_call.1} parent=1 // pred_region
      _
    $region5: #{tpu_custom_call.1} parent=1 // pred_fallthru
      _
    // Predicated region
    $region6: #{tpu_custom_call.1} parent=1 // pred_check
      _
    $region7: #{tpu_custom_call.1} parent=1 // pred_check_branch
      %12 = sbr.rel (0) target = $region9
    $region8: #{tpu_custom_call.1} parent=1 // pred_region
      _
    $region9: #{tpu_custom_call.1} parent=1 // pred_fallthru
      _
    // Predicated region
    $region10: #{tpu_custom_call.1} parent=1 // pred_check
      _
    $region11: #{tpu_custom_call.1} parent=1 // pred_check_branch
      %14 = sbr.rel (0) target = $region13
    $region12: #{tpu_custom_call.1} parent=1 // pred_region
      _
    $region13: #{tpu_custom_call.1} parent=1 // pred_fallthru
      _
    %v16 = vld [vmem:[%s0] sm:$0xf]
    %v17 = vld [vmem:[%s0 + $0x4] sm:$0xf]
    %v18 = vld [vmem:[%s0 + $0x8] sm:$0xf]
    %v19 = vld [vmem:[%s0 + $0xc] sm:$0xf]
    %v20 = vld [vmem:[%s0 + $0x10] sm:$0xf]
    %v21 = vld [vmem:[%s0 + $0x14] sm:$0xf]
    %v22 = vld [vmem:[%s0 + $0x18] sm:$0xf]
    %v23 = vld [vmem:[%s0 + $0x1c] sm:$0xf]
    %v24 = vld [vmem:[%s0 + $0x20] sm:$0xf]
    %v25 = vld [vmem:[%s0 + $0x24] sm:$0xf]
    %v26 = vld [vmem:[%s0 + $0x28] sm:$0xf]
    %v27 = vld [vmem:[%s0 + $0x2c] sm:$0xf]
    %v28 = vld [vmem:[%s0 + $0x30] sm:$0xf]
    %v29 = vld [vmem:[%s0 + $0x34] sm:$0xf]
    %v30 = vld [vmem:[%s0 + $0x38] sm:$0xf]
    %v31 = vld [vmem:[%s0 + $0x3c] sm:$0xf]
    %v32 = vld [vmem:[%s1] sm:$0xff]
    %v33 = vld [vmem:[%s1 + $0x8] sm:$0xff]
    %v34 = vld [vmem:[%s1 + $0x10] sm:$0xf]
    %v35 = vld [vmem:[%s1 + $0x14] sm:$0xff]
    %v36 = vld [vmem:[%s1 + $0x1c] sm:$0xff]
    %v37 = vld [vmem:[%s1 + $0x24] sm:$0xf]
    %v54 = vunpack.c.l.b16 %v16
    %v55 = vunpack.c.l.b16 %v17
    %v56 = vunpack.c.l.b16 %v18
    %v57 = vunpack.c.l.b16 %v19
    %v58 = vunpack.c.l.b16 %v20
    %v59 = vunpack.c.l.b16 %v21
    %v60 = vunpack.c.l.b16 %v22
    %v61 = vunpack.c.l.b16 %v23
    %v62 = vunpack.c.l.b16 %v24
    %v63 = vunpack.c.l.b16 %v25
    %v64 = vunpack.c.l.b16 %v26
    %v65 = vunpack.c.l.b16 %v27
    %v66 = vunpack.c.l.b16 %v28
    %v67 = vunpack.c.l.b16 %v29
    %v68 = vunpack.c.l.b16 %v30
    %v69 = vunpack.c.l.b16 %v31
    %v70 = vpack.c.b16 %v55, %v54
    %v71 = vpack.c.b16 %v57, %v56
    %v72 = vpack.c.b16 %v59, %v58
    %v73 = vpack.c.b16 %v61, %v60
    %v74 = vpack.c.b16 %v63, %v62
    %v75 = vpack.c.b16 %v65, %v64
    %v76 = vpack.c.b16 %v67, %v66
    %v77 = vpack.c.b16 %v69, %v68
    %v84 = vunpack.c.l.b16 %v32
    %v85 = vunpack.c.h.b16 %v32
    %v86 = vunpack.c.l.b16 %v33
    %v87 = vunpack.c.h.b16 %v33
    %v88 = vunpack.c.l.b16 %v34
    %v89 = vunpack.c.l.b16 %v35
    %v90 = vunpack.c.h.b16 %v35
    %v91 = vunpack.c.l.b16 %v36
    %v92 = vunpack.c.h.b16 %v36
    %v93 = vunpack.c.l.b16 %v37
    %v94 = vpack.c.b16 %v89, %v84
    %v95 = vpack.c.b16 %v90, %v85
    %v96 = vpack.c.b16 %v91, %v86
    %v97 = vpack.c.b16 %v92, %v87
    %v98 = vpack.c.b16 %v93, %v88
    %vm104 = vcmask 130048
    %v106 = vsel %vm104, %v70, 0
    %v109 = vsel %vm104, %v71, 0
    %v112 = vsel %vm104, %v72, 0
    %v115 = vsel %vm104, %v73, 0
    %v118 = vsel %vm104, %v74, 0
    %v121 = vsel %vm104, %v75, 0
    %v124 = vsel %vm104, %v76, 0
    %v127 = vsel %vm104, %v77, 0
    %129 = vmatpush.bf16.msra.mxu0 0
    %130 = vmatpush.bf16.msra.mxu0 0
    %131 = vmatpush.bf16.msra.mxu0 0
    %132 = vmatpush.bf16.msra.mxu0 0
    %133 = vmatpush.bf16.msra.mxu0 0
    %134 = vmatpush.bf16.msra.mxu0 0
    %135 = vmatpush.bf16.msra.mxu0 0
    %136 = vmatpush.bf16.msra.mxu0 %v94
    %137 = vmatmul.bf16.gmra.mxu0 %v106
    %v138 = vpop.f32.mrf.mxu0
    %v139 = vadd.f32 0.0, %v138
    %v140 = vpop.f32.mrf.mxu0
    %v141 = vadd.f32 0.0, %v140
    %142 = vmatmul.bf16.gmra.mxu0 %v109
    %v143 = vpop.f32.mrf.mxu0
    %v144 = vadd.f32 0.0, %v143
    %v145 = vpop.f32.mrf.mxu0
    %v146 = vadd.f32 0.0, %v145
    %147 = vmatmul.bf16.gmra.mxu0 %v112
    %v148 = vpop.f32.mrf.mxu0
    %v149 = vadd.f32 0.0, %v148
    %v150 = vpop.f32.mrf.mxu0
    %v151 = vadd.f32 0.0, %v150
    %152 = vmatmul.bf16.gmra.mxu0 %v115
    %v153 = vpop.f32.mrf.mxu0
    %v154 = vadd.f32 0.0, %v153
    %v155 = vpop.f32.mrf.mxu0
    %v156 = vadd.f32 0.0, %v155
    %157 = vmatmul.bf16.gmra.mxu0 %v118
    %v158 = vpop.f32.mrf.mxu0
    %v159 = vadd.f32 0.0, %v158
    %v160 = vpop.f32.mrf.mxu0
    %v161 = vadd.f32 0.0, %v160
    %162 = vmatmul.bf16.gmra.mxu0 %v121
    %v163 = vpop.f32.mrf.mxu0
    %v164 = vadd.f32 0.0, %v163
    %v165 = vpop.f32.mrf.mxu0
    %v166 = vadd.f32 0.0, %v165
    %167 = vmatmul.bf16.gmra.mxu0 %v124
    %v168 = vpop.f32.mrf.mxu0
    %v169 = vadd.f32 0.0, %v168
    %v170 = vpop.f32.mrf.mxu0
    %v171 = vadd.f32 0.0, %v170
    %172 = vmatmul.bf16.gmra.mxu0 %v127
    %v173 = vpop.f32.mrf.mxu0
    %v174 = vadd.f32 0.0, %v173
    %v175 = vpop.f32.mrf.mxu0
    %v176 = vadd.f32 0.0, %v175
    %177 = vdwg.mxu0
    %178 = vmatpush.bf16.msra.mxu0 0
    %179 = vmatpush.bf16.msra.mxu0 0
    %180 = vmatpush.bf16.msra.mxu0 0
    %181 = vmatpush.bf16.msra.mxu0 0
    %182 = vmatpush.bf16.msra.mxu0 0
    %183 = vmatpush.bf16.msra.mxu0 0
    %184 = vmatpush.bf16.msra.mxu0 0
    %185 = vmatpush.bf16.msra.mxu0 %v95
    %186 = vmatmul.bf16.gmra.mxu0 %v106
    %v187 = vpop.f32.mrf.mxu0
    %v188 = vadd.f32 0.0, %v187
    %v189 = vpop.f32.mrf.mxu0
    %v190 = vadd.f32 0.0, %v189
    %191 = vmatmul.bf16.gmra.mxu0 %v109
    %v192 = vpop.f32.mrf.mxu0
    %v193 = vadd.f32 0.0, %v192
    %v194 = vpop.f32.mrf.mxu0
    %v195 = vadd.f32 0.0, %v194
    %196 = vmatmul.bf16.gmra.mxu0 %v112
    %v197 = vpop.f32.mrf.mxu0
    %v198 = vadd.f32 0.0, %v197
    %v199 = vpop.f32.mrf.mxu0
    %v200 = vadd.f32 0.0, %v199
    %201 = vmatmul.bf16.gmra.mxu0 %v115
    %v202 = vpop.f32.mrf.mxu0
    %v203 = vadd.f32 0.0, %v202
    %v204 = vpop.f32.mrf.mxu0
    %v205 = vadd.f32 0.0, %v204
    %206 = vmatmul.bf16.gmra.mxu0 %v118
    %v207 = vpop.f32.mrf.mxu0
    %v208 = vadd.f32 0.0, %v207
    %v209 = vpop.f32.mrf.mxu0
    %v210 = vadd.f32 0.0, %v209
    %211 = vmatmul.bf16.gmra.mxu0 %v121
    %v212 = vpop.f32.mrf.mxu0
    %v213 = vadd.f32 0.0, %v212
    %v214 = vpop.f32.mrf.mxu0
    %v215 = vadd.f32 0.0, %v214
    %216 = vmatmul.bf16.gmra.mxu0 %v124
    %v217 = vpop.f32.mrf.mxu0
    %v218 = vadd.f32 0.0, %v217
    %v219 = vpop.f32.mrf.mxu0
    %v220 = vadd.f32 0.0, %v219
    %221 = vmatmul.bf16.gmra.mxu0 %v127
    %v222 = vpop.f32.mrf.mxu0
    %v223 = vadd.f32 0.0, %v222
    %v224 = vpop.f32.mrf.mxu0
    %v225 = vadd.f32 0.0, %v224
    %226 = vdwg.mxu0
    %227 = vmatpush.bf16.msra.mxu0 0
    %228 = vmatpush.bf16.msra.mxu0 0
    %229 = vmatpush.bf16.msra.mxu0 0
    %230 = vmatpush.bf16.msra.mxu0 0
    %231 = vmatpush.bf16.msra.mxu0 0
    %232 = vmatpush.bf16.msra.mxu0 0
    %233 = vmatpush.bf16.msra.mxu0 0
    %234 = vmatpush.bf16.msra.mxu0 %v96
    %235 = vmatmul.bf16.gmra.mxu0 %v106
    %v236 = vpop.f32.mrf.mxu0
    %v237 = vadd.f32 0.0, %v236
    %v238 = vpop.f32.mrf.mxu0
    %v239 = vadd.f32 0.0, %v238
    %240 = vmatmul.bf16.gmra.mxu0 %v109
    %v241 = vpop.f32.mrf.mxu0
    %v242 = vadd.f32 0.0, %v241
    %v243 = vpop.f32.mrf.mxu0
    %v244 = vadd.f32 0.0, %v243
    %245 = vmatmul.bf16.gmra.mxu0 %v112
    %v246 = vpop.f32.mrf.mxu0
    %v247 = vadd.f32 0.0, %v246
    %v248 = vpop.f32.mrf.mxu0
    %v249 = vadd.f32 0.0, %v248
    %250 = vmatmul.bf16.gmra.mxu0 %v115
    %v251 = vpop.f32.mrf.mxu0
    %v252 = vadd.f32 0.0, %v251
    %v253 = vpop.f32.mrf.mxu0
    %v254 = vadd.f32 0.0, %v253
    %255 = vmatmul.bf16.gmra.mxu0 %v118
    %v256 = vpop.f32.mrf.mxu0
    %v257 = vadd.f32 0.0, %v256
    %v258 = vpop.f32.mrf.mxu0
    %v259 = vadd.f32 0.0, %v258
    %260 = vmatmul.bf16.gmra.mxu0 %v121
    %v261 = vpop.f32.mrf.mxu0
    %v262 = vadd.f32 0.0, %v261
    %v263 = vpop.f32.mrf.mxu0
    %v264 = vadd.f32 0.0, %v263
    %265 = vmatmul.bf16.gmra.mxu0 %v124
    %v266 = vpop.f32.mrf.mxu0
    %v267 = vadd.f32 0.0, %v266
    %v268 = vpop.f32.mrf.mxu0
    %v269 = vadd.f32 0.0, %v268
    %270 = vmatmul.bf16.gmra.mxu0 %v127
    %v271 = vpop.f32.mrf.mxu0
    %v272 = vadd.f32 0.0, %v271
    %v273 = vpop.f32.mrf.mxu0
    %v274 = vadd.f32 0.0, %v273
    %275 = vdwg.mxu0
    %276 = vmatpush.bf16.msra.mxu0 0
    %277 = vmatpush.bf16.msra.mxu0 0
    %278 = vmatpush.bf16.msra.mxu0 0
    %279 = vmatpush.bf16.msra.mxu0 0
    %280 = vmatpush.bf16.msra.mxu0 0
    %281 = vmatpush.bf16.msra.mxu0 0
    %282 = vmatpush.bf16.msra.mxu0 0
    %283 = vmatpush.bf16.msra.mxu0 %v97
    %284 = vmatmul.bf16.gmra.mxu0 %v106
    %v285 = vpop.f32.mrf.mxu0
    %v286 = vadd.f32 0.0, %v285
    %v287 = vpop.f32.mrf.mxu0
    %v288 = vadd.f32 0.0, %v287
    %289 = vmatmul.bf16.gmra.mxu0 %v109
    %v290 = vpop.f32.mrf.mxu0
    %v291 = vadd.f32 0.0, %v290
    %v292 = vpop.f32.mrf.mxu0
    %v293 = vadd.f32 0.0, %v292
    %294 = vmatmul.bf16.gmra.mxu0 %v112
    %v295 = vpop.f32.mrf.mxu0
    %v296 = vadd.f32 0.0, %v295
    %v297 = vpop.f32.mrf.mxu0
    %v298 = vadd.f32 0.0, %v297
    %299 = vmatmul.bf16.gmra.mxu0 %v115
    %v300 = vpop.f32.mrf.mxu0
    %v301 = vadd.f32 0.0, %v300
    %v302 = vpop.f32.mrf.mxu0
    %v303 = vadd.f32 0.0, %v302
    %304 = vmatmul.bf16.gmra.mxu0 %v118
    %v305 = vpop.f32.mrf.mxu0
    %v306 = vadd.f32 0.0, %v305
    %v307 = vpop.f32.mrf.mxu0
    %v308 = vadd.f32 0.0, %v307
    %309 = vmatmul.bf16.gmra.mxu0 %v121
    %v310 = vpop.f32.mrf.mxu0
    %v311 = vadd.f32 0.0, %v310
    %v312 = vpop.f32.mrf.mxu0
    %v313 = vadd.f32 0.0, %v312
    %314 = vmatmul.bf16.gmra.mxu0 %v124
    %v315 = vpop.f32.mrf.mxu0
    %v316 = vadd.f32 0.0, %v315
    %v317 = vpop.f32.mrf.mxu0
    %v318 = vadd.f32 0.0, %v317
    %319 = vmatmul.bf16.gmra.mxu0 %v127
    %v320 = vpop.f32.mrf.mxu0
    %v321 = vadd.f32 0.0, %v320
    %v322 = vpop.f32.mrf.mxu0
    %v323 = vadd.f32 0.0, %v322
    %324 = vdwg.mxu0
    %325 = vmatpush.bf16.msra.mxu0 0
    %326 = vmatpush.bf16.msra.mxu0 0
    %327 = vmatpush.bf16.msra.mxu0 0
    %328 = vmatpush.bf16.msra.mxu0 0
    %329 = vmatpush.bf16.msra.mxu0 0
    %330 = vmatpush.bf16.msra.mxu0 0
    %331 = vmatpush.bf16.msra.mxu0 0
    %332 = vmatpush.bf16.msra.mxu0 %v98
    %333 = vmatmul.bf16.gmra.mxu0 %v106
    %v334 = vpop.f32.mrf.mxu0
    %v335 = vadd.f32 0.0, %v334
    %v336 = vpop.f32.mrf.mxu0
    %v337 = vadd.f32 0.0, %v336
    %338 = vmatmul.bf16.gmra.mxu0 %v109
    %v339 = vpop.f32.mrf.mxu0
    %v340 = vadd.f32 0.0, %v339
    %v341 = vpop.f32.mrf.mxu0
    %v342 = vadd.f32 0.0, %v341
    %343 = vmatmul.bf16.gmra.mxu0 %v112
    %v344 = vpop.f32.mrf.mxu0
    %v345 = vadd.f32 0.0, %v344
    %v346 = vpop.f32.mrf.mxu0
    %v347 = vadd.f32 0.0, %v346
    %348 = vmatmul.bf16.gmra.mxu0 %v115
    %v349 = vpop.f32.mrf.mxu0
    %v350 = vadd.f32 0.0, %v349
    %v351 = vpop.f32.mrf.mxu0
    %v352 = vadd.f32 0.0, %v351
    %353 = vmatmul.bf16.gmra.mxu0 %v118
    %v354 = vpop.f32.mrf.mxu0
    %v355 = vadd.f32 0.0, %v354
    %v356 = vpop.f32.mrf.mxu0
    %v357 = vadd.f32 0.0, %v356
    %358 = vmatmul.bf16.gmra.mxu0 %v121
    %v359 = vpop.f32.mrf.mxu0
    %v360 = vadd.f32 0.0, %v359
    %v361 = vpop.f32.mrf.mxu0
    %v362 = vadd.f32 0.0, %v361
    %363 = vmatmul.bf16.gmra.mxu0 %v124
    %v364 = vpop.f32.mrf.mxu0
    %v365 = vadd.f32 0.0, %v364
    %v366 = vpop.f32.mrf.mxu0
    %v367 = vadd.f32 0.0, %v366
    %368 = vmatmul.bf16.gmra.mxu0 %v127
    %v369 = vpop.f32.mrf.mxu0
    %v370 = vadd.f32 0.0, %v369
    %v371 = vpop.f32.mrf.mxu0
    %v372 = vadd.f32 0.0, %v371
    %373 = vdwg.mxu0
    %v390 = vrot.slane %v188, 1
    %v391 = vrot.slane %v190, 1
    %v392 = vrot.slane %v193, 1
    %v393 = vrot.slane %v195, 1
    %v394 = vrot.slane %v198, 1
    %v395 = vrot.slane %v200, 1
    %v396 = vrot.slane %v203, 1
    %v397 = vrot.slane %v205, 1
    %v398 = vrot.slane %v208, 1
    %v399 = vrot.slane %v210, 1
    %v400 = vrot.slane %v213, 1
    %v401 = vrot.slane %v215, 1
    %v402 = vrot.slane %v218, 1
    %v403 = vrot.slane %v220, 1
    %v404 = vrot.slane %v223, 1
    %v405 = vrot.slane %v225, 1
    %v422 = vadd.f32 %v139, %v390
    %v423 = vadd.f32 %v141, %v391
    %v424 = vadd.f32 %v144, %v392
    %v425 = vadd.f32 %v146, %v393
    %v426 = vadd.f32 %v149, %v394
    %v427 = vadd.f32 %v151, %v395
    %v428 = vadd.f32 %v154, %v396
    %v429 = vadd.f32 %v156, %v397
    %v430 = vadd.f32 %v159, %v398
    %v431 = vadd.f32 %v161, %v399
    %v432 = vadd.f32 %v164, %v400
    %v433 = vadd.f32 %v166, %v401
    %v434 = vadd.f32 %v169, %v402
    %v435 = vadd.f32 %v171, %v403
    %v436 = vadd.f32 %v174, %v404
    %v437 = vadd.f32 %v176, %v405
    %vm438 = vcmask 1046528
    %v439 = vsel %vm438, %v422, -inf
    %v440 = vrot.slane %v439, 4
    %v441 = vmax.f32 %v439, %v440
    %v442 = vrot.slane %v441, 2
    %v443 = vmax.f32 %v441, %v442
    %v444 = vrot.slane %v443, 1
    %v445 = vmax.f32 %v443, %v444
    %v446 = vsel %vm438, %v423, -inf
    %v447 = vrot.slane %v446, 4
    %v448 = vmax.f32 %v446, %v447
    %v449 = vrot.slane %v448, 2
    %v450 = vmax.f32 %v448, %v449
    %v451 = vrot.slane %v450, 1
    %v452 = vmax.f32 %v450, %v451
    %v453 = vsel %vm438, %v424, -inf
    %v454 = vrot.slane %v453, 4
    %v455 = vmax.f32 %v453, %v454
    %v456 = vrot.slane %v455, 2
    %v457 = vmax.f32 %v455, %v456
    %v458 = vrot.slane %v457, 1
    %v459 = vmax.f32 %v457, %v458
    %v460 = vsel %vm438, %v425, -inf
    %v461 = vrot.slane %v460, 4
    %v462 = vmax.f32 %v460, %v461
    %v463 = vrot.slane %v462, 2
    %v464 = vmax.f32 %v462, %v463
    %v465 = vrot.slane %v464, 1
    %v466 = vmax.f32 %v464, %v465
    %v467 = vsel %vm438, %v426, -inf
    %v468 = vrot.slane %v467, 4
    %v469 = vmax.f32 %v467, %v468
    %v470 = vrot.slane %v469, 2
    %v471 = vmax.f32 %v469, %v470
    %v472 = vrot.slane %v471, 1
    %v473 = vmax.f32 %v471, %v472
    %v474 = vsel %vm438, %v427, -inf
    %v475 = vrot.slane %v474, 4
    %v476 = vmax.f32 %v474, %v475
    %v477 = vrot.slane %v476, 2
    %v478 = vmax.f32 %v476, %v477
    %v479 = vrot.slane %v478, 1
    %v480 = vmax.f32 %v478, %v479
    %v481 = vsel %vm438, %v428, -inf
    %v482 = vrot.slane %v481, 4
    %v483 = vmax.f32 %v481, %v482
    %v484 = vrot.slane %v483, 2
    %v485 = vmax.f32 %v483, %v484
    %v486 = vrot.slane %v485, 1
    %v487 = vmax.f32 %v485, %v486
    %v488 = vsel %vm438, %v429, -inf
    %v489 = vrot.slane %v488, 4
    %v490 = vmax.f32 %v488, %v489
    %v491 = vrot.slane %v490, 2
    %v492 = vmax.f32 %v490, %v491
    %v493 = vrot.slane %v492, 1
    %v494 = vmax.f32 %v492, %v493
    %v495 = vsel %vm438, %v430, -inf
    %v496 = vrot.slane %v495, 4
    %v497 = vmax.f32 %v495, %v496
    %v498 = vrot.slane %v497, 2
    %v499 = vmax.f32 %v497, %v498
    %v500 = vrot.slane %v499, 1
    %v501 = vmax.f32 %v499, %v500
    %v502 = vsel %vm438, %v431, -inf
    %v503 = vrot.slane %v502, 4
    %v504 = vmax.f32 %v502, %v503
    %v505 = vrot.slane %v504, 2
    %v506 = vmax.f32 %v504, %v505
    %v507 = vrot.slane %v506, 1
    %v508 = vmax.f32 %v506, %v507
    %v509 = vsel %vm438, %v432, -inf
    %v510 = vrot.slane %v509, 4
    %v511 = vmax.f32 %v509, %v510
    %v512 = vrot.slane %v511, 2
    %v513 = vmax.f32 %v511, %v512
    %v514 = vrot.slane %v513, 1
    %v515 = vmax.f32 %v513, %v514
    %v516 = vsel %vm438, %v433, -inf
    %v517 = vrot.slane %v516, 4
    %v518 = vmax.f32 %v516, %v517
    %v519 = vrot.slane %v518, 2
    %v520 = vmax.f32 %v518, %v519
    %v521 = vrot.slane %v520, 1
    %v522 = vmax.f32 %v520, %v521
    %v523 = vsel %vm438, %v434, -inf
    %v524 = vrot.slane %v523, 4
    %v525 = vmax.f32 %v523, %v524
    %v526 = vrot.slane %v525, 2
    %v527 = vmax.f32 %v525, %v526
    %v528 = vrot.slane %v527, 1
    %v529 = vmax.f32 %v527, %v528
    %v530 = vsel %vm438, %v435, -inf
    %v531 = vrot.slane %v530, 4
    %v532 = vmax.f32 %v530, %v531
    %v533 = vrot.slane %v532, 2
    %v534 = vmax.f32 %v532, %v533
    %v535 = vrot.slane %v534, 1
    %v536 = vmax.f32 %v534, %v535
    %v537 = vsel %vm438, %v436, -inf
    %v538 = vrot.slane %v537, 4
    %v539 = vmax.f32 %v537, %v538
    %v540 = vrot.slane %v539, 2
    %v541 = vmax.f32 %v539, %v540
    %v542 = vrot.slane %v541, 1
    %v543 = vmax.f32 %v541, %v542
    %v544 = vsel %vm438, %v437, -inf
    %v545 = vrot.slane %v544, 4
    %v546 = vmax.f32 %v544, %v545
    %v547 = vrot.slane %v546, 2
    %v548 = vmax.f32 %v546, %v547
    %v549 = vrot.slane %v548, 1
    %v550 = vmax.f32 %v548, %v549
    %v567 = vrot.slane %v286, 1
    %v568 = vrot.slane %v288, 1
    %v569 = vrot.slane %v291, 1
    %v570 = vrot.slane %v293, 1
    %v571 = vrot.slane %v296, 1
    %v572 = vrot.slane %v298, 1
    %v573 = vrot.slane %v301, 1
    %v574 = vrot.slane %v303, 1
    %v575 = vrot.slane %v306, 1
    %v576 = vrot.slane %v308, 1
    %v577 = vrot.slane %v311, 1
    %v578 = vrot.slane %v313, 1
    %v579 = vrot.slane %v316, 1
    %v580 = vrot.slane %v318, 1
    %v581 = vrot.slane %v321, 1
    %v582 = vrot.slane %v323, 1
    %v599 = vadd.f32 %v237, %v567
    %v600 = vadd.f32 %v239, %v568
    %v601 = vadd.f32 %v242, %v569
    %v602 = vadd.f32 %v244, %v570
    %v603 = vadd.f32 %v247, %v571
    %v604 = vadd.f32 %v249, %v572
    %v605 = vadd.f32 %v252, %v573
    %v606 = vadd.f32 %v254, %v574
    %v607 = vadd.f32 %v257, %v575
    %v608 = vadd.f32 %v259, %v576
    %v609 = vadd.f32 %v262, %v577
    %v610 = vadd.f32 %v264, %v578
    %v611 = vadd.f32 %v267, %v579
    %v612 = vadd.f32 %v269, %v580
    %v613 = vadd.f32 %v272, %v581
    %v614 = vadd.f32 %v274, %v582
    %v631 = vrot.slane %v335, 2
    %v632 = vrot.slane %v337, 2
    %v633 = vrot.slane %v340, 2
    %v634 = vrot.slane %v342, 2
    %v635 = vrot.slane %v345, 2
    %v636 = vrot.slane %v347, 2
    %v637 = vrot.slane %v350, 2
    %v638 = vrot.slane %v352, 2
    %v639 = vrot.slane %v355, 2
    %v640 = vrot.slane %v357, 2
    %v641 = vrot.slane %v360, 2
    %v642 = vrot.slane %v362, 2
    %v643 = vrot.slane %v365, 2
    %v644 = vrot.slane %v367, 2
    %v645 = vrot.slane %v370, 2
    %v646 = vrot.slane %v372, 2
    %v663 = vadd.f32 %v599, %v631
    %v664 = vadd.f32 %v600, %v632
    %v665 = vadd.f32 %v601, %v633
    %v666 = vadd.f32 %v602, %v634
    %v667 = vadd.f32 %v603, %v635
    %v668 = vadd.f32 %v604, %v636
    %v669 = vadd.f32 %v605, %v637
    %v670 = vadd.f32 %v606, %v638
    %v671 = vadd.f32 %v607, %v639
    %v672 = vadd.f32 %v608, %v640
    %v673 = vadd.f32 %v609, %v641
    %v674 = vadd.f32 %v610, %v642
    %v675 = vadd.f32 %v611, %v643
    %v676 = vadd.f32 %v612, %v644
    %v677 = vadd.f32 %v613, %v645
    %v678 = vadd.f32 %v614, %v646
    %vm679 = vcmask 1045504
    %v680 = vsel %vm679, %v663, -inf
    %v681 = vrot.slane %v680, 4
    %v682 = vmax.f32 %v680, %v681
    %v683 = vrot.slane %v682, 2
    %v684 = vmax.f32 %v682, %v683
    %v685 = vrot.slane %v684, 1
    %v686 = vmax.f32 %v684, %v685
    %v687 = vsel %vm679, %v664, -inf
    %v688 = vrot.slane %v687, 4
    %v689 = vmax.f32 %v687, %v688
    %v690 = vrot.slane %v689, 2
    %v691 = vmax.f32 %v689, %v690
    %v692 = vrot.slane %v691, 1
    %v693 = vmax.f32 %v691, %v692
    %v694 = vsel %vm679, %v665, -inf
    %v695 = vrot.slane %v694, 4
    %v696 = vmax.f32 %v694, %v695
    %v697 = vrot.slane %v696, 2
    %v698 = vmax.f32 %v696, %v697
    %v699 = vrot.slane %v698, 1
    %v700 = vmax.f32 %v698, %v699
    %v701 = vsel %vm679, %v666, -inf
    %v702 = vrot.slane %v701, 4
    %v703 = vmax.f32 %v701, %v702
    %v704 = vrot.slane %v703, 2
    %v705 = vmax.f32 %v703, %v704
    %v706 = vrot.slane %v705, 1
    %v707 = vmax.f32 %v705, %v706
    %v708 = vsel %vm679, %v667, -inf
    %v709 = vrot.slane %v708, 4
    %v710 = vmax.f32 %v708, %v709
    %v711 = vrot.slane %v710, 2
    %v712 = vmax.f32 %v710, %v711
    %v713 = vrot.slane %v712, 1
    %v714 = vmax.f32 %v712, %v713
    %v715 = vsel %vm679, %v668, -inf
    %v716 = vrot.slane %v715, 4
    %v717 = vmax.f32 %v715, %v716
    %v718 = vrot.slane %v717, 2
    %v719 = vmax.f32 %v717, %v718
    %v720 = vrot.slane %v719, 1
    %v721 = vmax.f32 %v719, %v720
    %v722 = vsel %vm679, %v669, -inf
    %v723 = vrot.slane %v722, 4
    %v724 = vmax.f32 %v722, %v723
    %v725 = vrot.slane %v724, 2
    %v726 = vmax.f32 %v724, %v725
    %v727 = vrot.slane %v726, 1
    %v728 = vmax.f32 %v726, %v727
    %v729 = vsel %vm679, %v670, -inf
    %v730 = vrot.slane %v729, 4
    %v731 = vmax.f32 %v729, %v730
    %v732 = vrot.slane %v731, 2
    %v733 = vmax.f32 %v731, %v732
    %v734 = vrot.slane %v733, 1
    %v735 = vmax.f32 %v733, %v734
    %v736 = vsel %vm679, %v671, -inf
    %v737 = vrot.slane %v736, 4
    %v738 = vmax.f32 %v736, %v737
    %v739 = vrot.slane %v738, 2
    %v740 = vmax.f32 %v738, %v739
    %v741 = vrot.slane %v740, 1
    %v742 = vmax.f32 %v740, %v741
    %v743 = vsel %vm679, %v672, -inf
    %v744 = vrot.slane %v743, 4
    %v745 = vmax.f32 %v743, %v744
    %v746 = vrot.slane %v745, 2
    %v747 = vmax.f32 %v745, %v746
    %v748 = vrot.slane %v747, 1
    %v749 = vmax.f32 %v747, %v748
    %v750 = vsel %vm679, %v673, -inf
    %v751 = vrot.slane %v750, 4
    %v752 = vmax.f32 %v750, %v751
    %v753 = vrot.slane %v752, 2
    %v754 = vmax.f32 %v752, %v753
    %v755 = vrot.slane %v754, 1
    %v756 = vmax.f32 %v754, %v755
    %v757 = vsel %vm679, %v674, -inf
    %v758 = vrot.slane %v757, 4
    %v759 = vmax.f32 %v757, %v758
    %v760 = vrot.slane %v759, 2
    %v761 = vmax.f32 %v759, %v760
    %v762 = vrot.slane %v761, 1
    %v763 = vmax.f32 %v761, %v762
    %v764 = vsel %vm679, %v675, -inf
    %v765 = vrot.slane %v764, 4
    %v766 = vmax.f32 %v764, %v765
    %v767 = vrot.slane %v766, 2
    %v768 = vmax.f32 %v766, %v767
    %v769 = vrot.slane %v768, 1
    %v770 = vmax.f32 %v768, %v769
    %v771 = vsel %vm679, %v676, -inf
    %v772 = vrot.slane %v771, 4
    %v773 = vmax.f32 %v771, %v772
    %v774 = vrot.slane %v773, 2
    %v775 = vmax.f32 %v773, %v774
    %v776 = vrot.slane %v775, 1
    %v777 = vmax.f32 %v775, %v776
    %v778 = vsel %vm679, %v677, -inf
    %v779 = vrot.slane %v778, 4
    %v780 = vmax.f32 %v778, %v779
    %v781 = vrot.slane %v780, 2
    %v782 = vmax.f32 %v780, %v781
    %v783 = vrot.slane %v782, 1
    %v784 = vmax.f32 %v782, %v783
    %v785 = vsel %vm679, %v678, -inf
    %v786 = vrot.slane %v785, 4
    %v787 = vmax.f32 %v785, %v786
    %v788 = vrot.slane %v787, 2
    %v789 = vmax.f32 %v787, %v788
    %v790 = vrot.slane %v789, 1
    %v791 = vmax.f32 %v789, %v790
    %vm808 = vcmask 1041409
    %v809 = vsel %vm808, %v452, %v445
    %vm810 = vcmask 1042434
    %v811 = vsel %vm810, %v459, %v809
    %vm812 = vcmask 1043459
    %v813 = vsel %vm812, %v466, %v811
    %vm814 = vcmask 1044484
    %v815 = vsel %vm814, %v473, %v813
    %vm816 = vcmask 1045509
    %v817 = vsel %vm816, %v480, %v815
    %vm818 = vcmask 1046534
    %v819 = vsel %vm818, %v487, %v817
    %vm820 = vcmask 1047559
    %v821 = vsel %vm820, %v494, %v819
    %v822 = vsel %vm808, %v508, %v501
    %v823 = vsel %vm810, %v515, %v822
    %v824 = vsel %vm812, %v522, %v823
    %v825 = vsel %vm814, %v529, %v824
    %v826 = vsel %vm816, %v536, %v825
    %v827 = vsel %vm818, %v543, %v826
    %v828 = vsel %vm820, %v550, %v827
    %v847 = vsel %vm808, %v693, %v686
    %v848 = vsel %vm810, %v700, %v847
    %v849 = vsel %vm812, %v707, %v848
    %v850 = vsel %vm814, %v714, %v849
    %v851 = vsel %vm816, %v721, %v850
    %v852 = vsel %vm818, %v728, %v851
    %v853 = vsel %vm820, %v735, %v852
    %v854 = vsel %vm808, %v749, %v742
    %v855 = vsel %vm810, %v756, %v854
    %v856 = vsel %vm812, %v763, %v855
    %v857 = vsel %vm814, %v770, %v856
    %v858 = vsel %vm816, %v777, %v857
    %v859 = vsel %vm818, %v784, %v858
    %v860 = vsel %vm820, %v791, %v859
    %861 = vrot.lane.b32.xlu0 %v853, 8
    %v862 = vpop.permute.xlu0 %861
    %863 = vrot.lane.b32.xlu0 %v860, 8
    %v864 = vpop.permute.xlu0 %863
    %vm867 = vcmask 64512
    %v868 = vsel %vm867, %v821, %v862
    %v869 = vsel %vm867, %v828, %v864
    %v870 = vsel %vm104, %v868, 0.0
    %v871 = vsel %vm104, %v869, 0.0
    %v872 = vld [vmem:[%s2] sm:$0x1]
    %v874 = vperm.slane %v872, 0
    %v876 = vadd.f32 %v870, %v874
    %v877 = vadd.f32 %v871, %v874
    %878 = vst [vmem:[#allocation2] sm:$0xff] %v876
    %879 = vst [vmem:[#allocation2 + $0x8] sm:$0xff] %v877
    // Predicated region
    $region14: #{tpu_custom_call.1} parent=1 // pred_check
      _
    $region15: #{tpu_custom_call.1} parent=1 // pred_check_branch
      %881 = sbr.rel (0) target = $region17
    $region16: #{tpu_custom_call.1} parent=1 // pred_region
      %883 = vsyncadd [#allocation3], 0
      %s884 = sshll.u32 [#allocation2], 4
      %s885 = int_to_ptr.vmem [resolvable:$true] %s884
      %s886 = sshll.u32 %s3, 4
      %s887 = int_to_ptr.hbm [resolvable:$true] %s886
      %892 = dma.vmem_to_hbm [thread:$0]  %s885, 256, %s887, [#allocation3], 128, 128, 8
    $region17: #{tpu_custom_call.1} parent=1 // pred_fallthru
      _
    // Predicated region
    $region18: #{tpu_custom_call.1} parent=1 // pred_check
      _
    $region19: #{tpu_custom_call.1} parent=1 // pred_check_branch
      %894 = sbr.rel (0) target = $region21
    $region20: #{tpu_custom_call.1} parent=1 // pred_region
      %896 = dma.done [#allocation3], 256
    $region21: #{tpu_custom_call.1} parent=1 // pred_fallthru
      _
    %897 = vsyncpa [#allocation3], 1

</llo_original>
